<compile_context>
chip_gen: v5e
topology: v5e:2x2
jax: 0.10.0
libtpu: 0.0.40
codegen_flags: <defaults>
</compile_context>

<pallas_src>
import jax
import jax.numpy as jnp
from jax.experimental import pallas as pl
from jax.experimental.pallas import tpu as pltpu


def _round_up(n, m):
    return ((n + m - 1) // m) * m


def _mlp_kernel(xt_ref, w1_ref, w2_ref, pk_ref, o_ref):
    """Feature-major MLP: fc1(+BN1)+ReLU -> fc2(+BN2)+ReLU -> fc3 (VPU/XLU)."""
    xt = xt_ref[...]                       # (D, TB)  bf16, batch on lanes
    pk = pk_ref[...]                       # (128, 8) f32 packed bias/w3 tile
    b1 = pk[:, 0:1]                        # (128, 1)  folded fc1+bn1 bias
    b2 = pk[0:32, 1:2]                     # (32, 1)   folded fc2+bn2 bias
    w3 = pk[0:32, 2:3]                     # (32, 1)   fc3 weight column
    b3 = pk[0:1, 3:4]                      # (1, 1)    fc3 bias

    # fc1 (+ folded BN1) + ReLU : (128, TB), f32 accumulation on the MXU.
    h1 = jnp.dot(w1_ref[...], xt, preferred_element_type=jnp.float32) + b1
    h1 = jnp.maximum(h1, 0.0)
    # dropout(p=0.2): identity in eval mode.

    # fc2 (+ folded BN2) + ReLU : (32, TB).
    h2 = jnp.dot(w2_ref[...], h1.astype(jnp.bfloat16),
                 preferred_element_type=jnp.float32) + b2
    h2 = jnp.maximum(h2, 0.0)
    # dropout(p=0.2): identity in eval mode.

    # fc3 (out_features == 1): VPU multiply + sublane reduction instead of an
    # N=1 MXU matmul; output row (1, TB) is lane-dense.
    o_ref[...] = jnp.sum(h2 * w3, axis=0, keepdims=True) + b3


def _fold_bn(w_oi, b, gamma, beta, mean, var, eps=1e-5):
    """Fold eval-mode BatchNorm1d into the preceding Linear ((out, in) layout)."""
    scale = gamma / jnp.sqrt(var + eps)                  # (F,)
    return w_oi * scale[:, None], b * scale + (beta - mean * scale)


def house_value_predictor(x, params, *, tile_b=2048):
    """Wrapper: BN folding, bf16 cast, feature-major transpose, Pallas call."""
    x = x.astype(jnp.float32)
    B, D = x.shape

    w1, b1 = _fold_bn(params["w1"], params["b1"],
                      params["bn1_gamma"], params["bn1_beta"],
                      params["bn1_mean"], params["bn1_var"])
    w2, b2 = _fold_bn(params["w2"], params["b2"],
                      params["bn2_gamma"], params["bn2_beta"],
                      params["bn2_mean"], params["bn2_var"])

    # bf16 matmul operands, f32 accumulation inside the kernel.
    w1 = w1.astype(jnp.bfloat16)                         # (128, D)
    w2 = w2.astype(jnp.bfloat16)                         # (32, 128)

    # Pack biases + fc3 column into one resident f32 tile (columns 0..3).
    pack = jnp.zeros((128, 8), jnp.float32)
    pack = pack.at[:, 0].set(b1)
    pack = pack.at[:32, 1].set(b2)
    pack = pack.at[:32, 2].set(params["w3"][0])
    pack = pack.at[0, 3].set(params["b3"][0])

    # Pad batch to a lane-aligned size; padded columns are zero and sliced off.
    Bp = _round_up(B, 128)
    gridless = Bp <= 256
    if not gridless:
        # At least two grid steps so v7x megacore shards the "parallel" axis.
        half = _round_up(-(-Bp // 2), 128)
        tb = max(128, (min(tile_b, half) // 128) * 128)
        Bp = _round_up(Bp, tb)

    # Feature-major activations: (D, Bp), batch on the lane axis.
    xt = jnp.pad(x.T.astype(jnp.bfloat16), ((0, 0), (0, Bp - B)))

    out_shape = jax.ShapeDtypeStruct((1, Bp), jnp.float32)
    args = (xt, w1, w2, pack)

    if gridless:
        # Tiny problem: whole-array VMEM operands, no pipeline.
        yt = pl.pallas_call(
            _mlp_kernel,
            out_shape=out_shape,
            in_specs=[pl.BlockSpec(memory_space=pltpu.MemorySpace.VMEM)] * len(args),
            out_specs=pl.BlockSpec(memory_space=pltpu.MemorySpace.VMEM),
        )(*args)
    else:
        # Batch-tiled grid (>= 2 steps): weights/bias resident via constant
        # index_maps, batch axis "parallel" for megacore sharding.
        yt = pl.pallas_call(
            _mlp_kernel,
            out_shape=out_shape,
            grid=(pl.cdiv(Bp, tb),),
            in_specs=[
                pl.BlockSpec((D, tb), lambda i: (0, i)),
                pl.BlockSpec(w1.shape, lambda i: (0, 0)),
                pl.BlockSpec(w2.shape, lambda i: (0, 0)),
                pl.BlockSpec(pack.shape, lambda i: (0, 0)),
            ],
            out_specs=pl.BlockSpec((1, tb), lambda i: (0, i)),
            compiler_params=pltpu.CompilerParams(
                dimension_semantics=("parallel",),
            ),
        )(*args)

    # (1, Bp) lane-dense row -> (B, 1) column (free, contiguous reshape).
    return yt[:, :B].reshape(B, 1)


def init_params(key, input_dim):
    """Deterministic init mirroring the PyTorch module (weights in (out, in) layout)."""
    keys = jax.random.split(key, 10)

    def linear(kw, kb, fan_in, fan_out):
        bound = 1.0 / jnp.sqrt(fan_in)
        w = jax.random.uniform(kw, (fan_out, fan_in), jnp.float32, -bound, bound)
        b = jax.random.uniform(kb, (fan_out,), jnp.float32, -bound, bound)
        return w, b

    w1, b1 = linear(keys[0], keys[1], input_dim, 128)
    w2, b2 = linear(keys[2], keys[3], 128, 32)
    w3, b3 = linear(keys[4], keys[5], 32, 1)

    return dict(
        w1=w1, b1=b1,
        bn1_gamma=1.0 + 0.1 * jax.random.normal(keys[6], (128,), jnp.float32),
        bn1_beta=0.1 * jax.random.normal(keys[7], (128,), jnp.float32),
        bn1_mean=jnp.zeros((128,), jnp.float32),
        bn1_var=jnp.ones((128,), jnp.float32),
        w2=w2, b2=b2,
        bn2_gamma=1.0 + 0.1 * jax.random.normal(keys[8], (32,), jnp.float32),
        bn2_beta=0.1 * jax.random.normal(keys[9], (32,), jnp.float32),
        bn2_mean=jnp.zeros((32,), jnp.float32),
        bn2_var=jnp.ones((32,), jnp.float32),
        w3=w3, b3=b3,
    )


def reference_forward(x, params):
    """Pure-JAX f32 reference (eval mode, un-folded BN), PyTorch semantics."""
    eps = 1e-5
    h = x @ params["w1"].T + params["b1"]
    h = (h - params["bn1_mean"]) / jnp.sqrt(params["bn1_var"] + eps)
    h = h * params["bn1_gamma"] + params["bn1_beta"]
    h = jnp.maximum(h, 0.0)
    h = h @ params["w2"].T + params["b2"]
    h = (h - params["bn2_mean"]) / jnp.sqrt(params["bn2_var"] + eps)
    h = h * params["bn2_gamma"] + params["bn2_beta"]
    h = jnp.maximum(h, 0.0)
    return h @ params["w3"].T + params["b3"]


if __name__ == "__main__":
    key = jax.random.PRNGKey(0)
    k_param, k_x, k_big = jax.random.split(key, 3)

    batch, input_dim = 8, 16
    params = init_params(k_param, input_dim)

    # Small batch -> gridless whole-VMEM path.
    x = jax.random.normal(k_x, (batch, input_dim), jnp.float32)
    out = jax.block_until_ready(house_value_predictor(x, params))
    ref = reference_forward(x, params)
    assert out.shape == (batch, 1), out.shape
    # bf16 operands -> loosened tolerances (f32 accumulation keeps error small).
    assert jnp.allclose(out, ref, atol=5e-2, rtol=5e-2), (out, ref)

    # Larger batch -> batch-tiled "parallel" grid path (>= 2 tiles, resident weights).
    x_big = jax.random.normal(k_big, (1000, input_dim), jnp.float32)
    out_big = jax.block_until_ready(house_value_predictor(x_big, params))
    ref_big = reference_forward(x_big, params)
    assert out_big.shape == (1000, 1), out_big.shape
    assert jnp.allclose(out_big, ref_big, atol=5e-2, rtol=5e-2)

    print("KERNEL_OK")
</pallas_src>

<mosaic_0001>
module attributes {stable_mosaic.version = 11 : i64} {
  func.func @_mlp_kernel(%arg0: memref<16x128xbf16, #tpu.memory_space<vmem>>, %arg1: memref<128x16xbf16, #tpu.memory_space<vmem>>, %arg2: memref<32x128xbf16, #tpu.memory_space<vmem>>, %arg3: memref<128x8xf32, #tpu.memory_space<vmem>>, %arg4: memref<1x128xf32, #tpu.memory_space<vmem>>) attributes {dimension_semantics = [], scalar_prefetch = 0 : i64, scratch_operands = 0 : i64, tpu.core_type = #tpu.core_type<tc>} {
    %c0 = arith.constant 0 : index
    %c0_0 = arith.constant 0 : index
    %0 = vector.load %arg0[%c0, %c0_0] : memref<16x128xbf16, #tpu.memory_space<vmem>>, vector<16x128xbf16>
    %c0_1 = arith.constant 0 : index
    %c0_2 = arith.constant 0 : index
    %1 = vector.load %arg3[%c0_1, %c0_2] : memref<128x8xf32, #tpu.memory_space<vmem>>, vector<128x8xf32>
    %2 = vector.extract_strided_slice %1 {offsets = [0, 0], sizes = [128, 1], strides = [1, 1]} : vector<128x8xf32> to vector<128x1xf32>
    %3 = vector.extract_strided_slice %1 {offsets = [0, 1], sizes = [32, 1], strides = [1, 1]} : vector<128x8xf32> to vector<32x1xf32>
    %4 = vector.extract_strided_slice %1 {offsets = [0, 2], sizes = [32, 1], strides = [1, 1]} : vector<128x8xf32> to vector<32x1xf32>
    %5 = vector.extract_strided_slice %1 {offsets = [0, 3], sizes = [1, 1], strides = [1, 1]} : vector<128x8xf32> to vector<1x1xf32>
    %c0_3 = arith.constant 0 : index
    %c0_4 = arith.constant 0 : index
    %6 = vector.load %arg1[%c0_3, %c0_4] : memref<128x16xbf16, #tpu.memory_space<vmem>>, vector<128x16xbf16>
    %cst = arith.constant dense<0.000000e+00> : vector<128x128xf32>
    %7 = tpu.matmul %6, %0, %cst {dimension_numbers = #tpu.dot_dimension_numbers<[1], [0], [0], [1], [0, 0, 1, 1], [], []>} : vector<128x16xbf16>, vector<16x128xbf16>, vector<128x128xf32> -> vector<128x128xf32>
    %8 = vector.broadcast %2 : vector<128x1xf32> to vector<128x128xf32>
    %9 = arith.addf %7, %8 : vector<128x128xf32>
    %cst_5 = arith.constant 0.000000e+00 : f32
    %10 = vector.broadcast %cst_5 : f32 to vector<128x128xf32>
    %11 = arith.maximumf %9, %10 : vector<128x128xf32>
    %c0_6 = arith.constant 0 : index
    %c0_7 = arith.constant 0 : index
    %12 = vector.load %arg2[%c0_6, %c0_7] : memref<32x128xbf16, #tpu.memory_space<vmem>>, vector<32x128xbf16>
    %13 = arith.truncf %11 : vector<128x128xf32> to vector<128x128xbf16>
    %cst_8 = arith.constant dense<0.000000e+00> : vector<32x128xf32>
    %14 = tpu.matmul %12, %13, %cst_8 {dimension_numbers = #tpu.dot_dimension_numbers<[1], [0], [0], [1], [0, 0, 1, 1], [], []>} : vector<32x128xbf16>, vector<128x128xbf16>, vector<32x128xf32> -> vector<32x128xf32>
    %15 = vector.broadcast %3 : vector<32x1xf32> to vector<32x128xf32>
    %16 = arith.addf %14, %15 : vector<32x128xf32>
    %cst_9 = arith.constant 0.000000e+00 : f32
    %17 = vector.broadcast %cst_9 : f32 to vector<32x128xf32>
    %18 = arith.maximumf %16, %17 : vector<32x128xf32>
    %19 = vector.broadcast %4 : vector<32x1xf32> to vector<32x128xf32>
    %20 = arith.mulf %18, %19 : vector<32x128xf32>
    %cst_10 = arith.constant dense<0.000000e+00> : vector<128xf32>
    %21 = vector.multi_reduction <add>, %20, %cst_10 [0] : vector<32x128xf32> to vector<128xf32>
    %22 = vector.shape_cast %21 : vector<128xf32> to vector<1x128xf32>
    %23 = vector.broadcast %5 : vector<1x1xf32> to vector<1x128xf32>
    %24 = arith.addf %22, %23 : vector<1x128xf32>
    %c0_11 = arith.constant 0 : index
    %c0_12 = arith.constant 0 : index
    %25 = vector.load %arg4[%c0_11, %c0_12] : memref<1x128xf32, #tpu.memory_space<vmem>>, vector<1x128xf32>
    tpu.vector_store %arg4[%c0_11, %c0_12], %24 {strides = array<i32>} : memref<1x128xf32, #tpu.memory_space<vmem>>, vector<1x128xf32>,
    return
  }
}

</mosaic_0001>

<llo_original>
// kernel: tpu_custom_call.1
$region0: #{tpu_custom_call.1}
  #allocation0 [shape = 'u32[]', space=smem, size = 0x4, offset = 0x4, fixed_abs, tag = 'smem constant byte address 0x4 - core index']
  #allocation1 [shape = 'u32[72,128]{1,0:T(1,128)}', space=vmem, size = 0x9000, scoped, tag = 'internal scratch']
  %s0 = inlined_call_operand.vmem [shape: bf16[16,128], index: 0, kind: input, shape index: {}]
  %s1 = inlined_call_operand.vmem [shape: bf16[128,16], index: 1, kind: input, shape index: {}]
  %s2 = inlined_call_operand.vmem [shape: bf16[32,128], index: 2, kind: input, shape index: {}]
  %s3 = inlined_call_operand.vmem [shape: f32[128,8], index: 3, kind: input, shape index: {}]
  %s4 = inlined_call_operand.hbm [shape: f32[1,128], index: 4, kind: output, shape index: {}]
  %s5 = sld [smem:[#allocation0]]
  $region26: #{tpu_custom_call.1} parent=0
    _
  %s7 = ssub.s32 1, %s5
  %s8 = scalar_select 0, %s7, %s5
  $region1: #{tpu_custom_call.1} parent=0
    #allocation2 [shape = 'u8[512]{0}', space=vmem, size = 0x400, scoped, tag = 'output window, operand 0, single buffered']
    #allocation3 [shape = 's32[1]{0}', space=sflag, size = 0x4, scoped, tag = 'scoped memory for tpu_custom_call.1']
    %9 = vsyncpa [#allocation3], 0
    // Predicated region
    $region2: #{tpu_custom_call.1} parent=1 // pred_check
      _
    $region3: #{tpu_custom_call.1} parent=1 // pred_check_branch
      %11 = sbr.rel (0) target = $region5
    $region4: #{tpu_custom_call.1} parent=1 // pred_region
      _
    $region5: #{tpu_custom_call.1} parent=1 // pred_fallthru
      _
    // Predicated region
    $region6: #{tpu_custom_call.1} parent=1 // pred_check
      _
    $region7: #{tpu_custom_call.1} parent=1 // pred_check_branch
      %13 = sbr.rel (0) target = $region9
    $region8: #{tpu_custom_call.1} parent=1 // pred_region
      _
    $region9: #{tpu_custom_call.1} parent=1 // pred_fallthru
      _
    // Predicated region
    $region10: #{tpu_custom_call.1} parent=1 // pred_check
      _
    $region11: #{tpu_custom_call.1} parent=1 // pred_check_branch
      %15 = sbr.rel (0) target = $region13
    $region12: #{tpu_custom_call.1} parent=1 // pred_region
      _
    $region13: #{tpu_custom_call.1} parent=1 // pred_fallthru
      _
    // Predicated region
    $region14: #{tpu_custom_call.1} parent=1 // pred_check
      _
    $region15: #{tpu_custom_call.1} parent=1 // pred_check_branch
      %17 = sbr.rel (0) target = $region17
    $region16: #{tpu_custom_call.1} parent=1 // pred_region
      _
    $region17: #{tpu_custom_call.1} parent=1 // pred_fallthru
      _
    %v19 = vld [vmem:[%s0] sm:$0xf]
    %v20 = vld [vmem:[%s0 + $0x4] sm:$0xf]
    %v21 = vld [vmem:[%s3] sm:$0xff]
    %v22 = vld [vmem:[%s3 + $0x8] sm:$0xff]
    %v23 = vld [vmem:[%s3 + $0x10] sm:$0xff]
    %v24 = vld [vmem:[%s3 + $0x18] sm:$0xff]
    %v25 = vld [vmem:[%s3 + $0x20] sm:$0xff]
    %v26 = vld [vmem:[%s3 + $0x28] sm:$0xff]
    %v27 = vld [vmem:[%s3 + $0x30] sm:$0xff]
    %v28 = vld [vmem:[%s3 + $0x38] sm:$0xff]
    %v29 = vld [vmem:[%s3 + $0x40] sm:$0xff]
    %v30 = vld [vmem:[%s3 + $0x48] sm:$0xff]
    %v31 = vld [vmem:[%s3 + $0x50] sm:$0xff]
    %v32 = vld [vmem:[%s3 + $0x58] sm:$0xff]
    %v33 = vld [vmem:[%s3 + $0x60] sm:$0xff]
    %v34 = vld [vmem:[%s3 + $0x68] sm:$0xff]
    %v35 = vld [vmem:[%s3 + $0x70] sm:$0xff]
    %v36 = vld [vmem:[%s3 + $0x78] sm:$0xff]
    %v37 = vld [vmem:[%s1] sm:$0xf]
    %v38 = vld [vmem:[%s1 + $0x4] sm:$0xf]
    %v39 = vld [vmem:[%s1 + $0x8] sm:$0xf]
    %v40 = vld [vmem:[%s1 + $0xc] sm:$0xf]
    %v41 = vld [vmem:[%s1 + $0x10] sm:$0xf]
    %v42 = vld [vmem:[%s1 + $0x14] sm:$0xf]
    %v43 = vld [vmem:[%s1 + $0x18] sm:$0xf]
    %v44 = vld [vmem:[%s1 + $0x1c] sm:$0xf]
    %v45 = vld [vmem:[%s1 + $0x20] sm:$0xf]
    %v46 = vld [vmem:[%s1 + $0x24] sm:$0xf]
    %v47 = vld [vmem:[%s1 + $0x28] sm:$0xf]
    %v48 = vld [vmem:[%s1 + $0x2c] sm:$0xf]
    %v49 = vld [vmem:[%s1 + $0x30] sm:$0xf]
    %v50 = vld [vmem:[%s1 + $0x34] sm:$0xf]
    %v51 = vld [vmem:[%s1 + $0x38] sm:$0xf]
    %v52 = vld [vmem:[%s1 + $0x3c] sm:$0xf]
    %54 = vset.pattern.permute.xlu0 0
    %55 = vperm.xlu0 %54, %v21
    %v56 = vpop.permute.xlu0 %55
    %59 = vset.pattern.permute.xlu0 0
    %60 = vperm.xlu0 %59, %v22
    %v61 = vpop.permute.xlu0 %60
    %64 = vset.pattern.permute.xlu0 0
    %65 = vperm.xlu0 %64, %v23
    %v66 = vpop.permute.xlu0 %65
    %69 = vset.pattern.permute.xlu0 0
    %70 = vperm.xlu0 %69, %v24
    %v71 = vpop.permute.xlu0 %70
    %74 = vset.pattern.permute.xlu0 0
    %75 = vperm.xlu0 %74, %v25
    %v76 = vpop.permute.xlu0 %75
    %79 = vset.pattern.permute.xlu0 0
    %80 = vperm.xlu0 %79, %v26
    %v81 = vpop.permute.xlu0 %80
    %84 = vset.pattern.permute.xlu0 0
    %85 = vperm.xlu0 %84, %v27
    %v86 = vpop.permute.xlu0 %85
    %89 = vset.pattern.permute.xlu0 0
    %90 = vperm.xlu0 %89, %v28
    %v91 = vpop.permute.xlu0 %90
    %94 = vset.pattern.permute.xlu0 0
    %95 = vperm.xlu0 %94, %v29
    %v96 = vpop.permute.xlu0 %95
    %99 = vset.pattern.permute.xlu0 0
    %100 = vperm.xlu0 %99, %v30
    %v101 = vpop.permute.xlu0 %100
    %104 = vset.pattern.permute.xlu0 0
    %105 = vperm.xlu0 %104, %v31
    %v106 = vpop.permute.xlu0 %105
    %109 = vset.pattern.permute.xlu0 0
    %110 = vperm.xlu0 %109, %v32
    %v111 = vpop.permute.xlu0 %110
    %114 = vset.pattern.permute.xlu0 0
    %115 = vperm.xlu0 %114, %v33
    %v116 = vpop.permute.xlu0 %115
    %119 = vset.pattern.permute.xlu0 0
    %120 = vperm.xlu0 %119, %v34
    %v121 = vpop.permute.xlu0 %120
    %124 = vset.pattern.permute.xlu0 0
    %125 = vperm.xlu0 %124, %v35
    %v126 = vpop.permute.xlu0 %125
    %129 = vset.pattern.permute.xlu0 0
    %130 = vperm.xlu0 %129, %v36
    %v131 = vpop.permute.xlu0 %130
    %v149 = vunpack.c.l.b16 %v37
    %v150 = vunpack.c.l.b16 %v38
    %v151 = vunpack.c.l.b16 %v39
    %v152 = vunpack.c.l.b16 %v40
    %v153 = vunpack.c.l.b16 %v41
    %v154 = vunpack.c.l.b16 %v42
    %v155 = vunpack.c.l.b16 %v43
    %v156 = vunpack.c.l.b16 %v44
    %v157 = vunpack.c.l.b16 %v45
    %v158 = vunpack.c.l.b16 %v46
    %v159 = vunpack.c.l.b16 %v47
    %v160 = vunpack.c.l.b16 %v48
    %v161 = vunpack.c.l.b16 %v49
    %v162 = vunpack.c.l.b16 %v50
    %v163 = vunpack.c.l.b16 %v51
    %v164 = vunpack.c.l.b16 %v52
    %v165 = vpack.c.b16 %v150, %v149
    %v166 = vpack.c.b16 %v152, %v151
    %v167 = vpack.c.b16 %v154, %v153
    %v168 = vpack.c.b16 %v156, %v155
    %v169 = vpack.c.b16 %v158, %v157
    %v170 = vpack.c.b16 %v160, %v159
    %v171 = vpack.c.b16 %v162, %v161
    %v172 = vpack.c.b16 %v164, %v163
    %v175 = vunpack.c.l.b16 %v19
    %v176 = vunpack.c.l.b16 %v20
    %v177 = vpack.c.b16 %v176, %v175
    %vm179 = vcmask 130048
    %v181 = vsel %vm179, %v165, 0
    %v184 = vsel %vm179, %v166, 0
    %v187 = vsel %vm179, %v167, 0
    %v190 = vsel %vm179, %v168, 0
    %v193 = vsel %vm179, %v169, 0
    %v196 = vsel %vm179, %v170, 0
    %v199 = vsel %vm179, %v171, 0
    %v202 = vsel %vm179, %v172, 0
    %204 = vmatpush.bf16.msra.mxu0 0
    %205 = vmatpush.bf16.msra.mxu0 0
    %206 = vmatpush.bf16.msra.mxu0 0
    %207 = vmatpush.bf16.msra.mxu0 0
    %208 = vmatpush.bf16.msra.mxu0 0
    %209 = vmatpush.bf16.msra.mxu0 0
    %210 = vmatpush.bf16.msra.mxu0 0
    %211 = vmatpush.bf16.msra.mxu0 %v177
    %212 = vmatmul.bf16.gmra.mxu0 %v181
    %v213 = vpop.f32.mrf.mxu0
    %v214 = vadd.f32 %v56, %v213
    %v215 = vpop.f32.mrf.mxu0
    %v216 = vadd.f32 %v61, %v215
    %217 = vmatmul.bf16.gmra.mxu0 %v184
    %v218 = vpop.f32.mrf.mxu0
    %v219 = vadd.f32 %v66, %v218
    %v220 = vpop.f32.mrf.mxu0
    %v221 = vadd.f32 %v71, %v220
    %222 = vmatmul.bf16.gmra.mxu0 %v187
    %v223 = vpop.f32.mrf.mxu0
    %v224 = vadd.f32 %v76, %v223
    %v225 = vpop.f32.mrf.mxu0
    %v226 = vadd.f32 %v81, %v225
    %227 = vmatmul.bf16.gmra.mxu0 %v190
    %v228 = vpop.f32.mrf.mxu0
    %v229 = vadd.f32 %v86, %v228
    %v230 = vpop.f32.mrf.mxu0
    %v231 = vadd.f32 %v91, %v230
    %232 = vmatmul.bf16.gmra.mxu0 %v193
    %v233 = vpop.f32.mrf.mxu0
    %v234 = vadd.f32 %v96, %v233
    %v235 = vpop.f32.mrf.mxu0
    %v236 = vadd.f32 %v101, %v235
    %237 = vmatmul.bf16.gmra.mxu0 %v196
    %v238 = vpop.f32.mrf.mxu0
    %v239 = vadd.f32 %v106, %v238
    %v240 = vpop.f32.mrf.mxu0
    %v241 = vadd.f32 %v111, %v240
    %242 = vmatmul.bf16.gmra.mxu0 %v199
    %v243 = vpop.f32.mrf.mxu0
    %v244 = vadd.f32 %v116, %v243
    %v245 = vpop.f32.mrf.mxu0
    %v246 = vadd.f32 %v121, %v245
    %247 = vmatmul.bf16.gmra.mxu0 %v202
    %v248 = vpop.f32.mrf.mxu0
    %v249 = vadd.f32 %v126, %v248
    %v250 = vpop.f32.mrf.mxu0
    %v251 = vadd.f32 %v131, %v250
    %252 = vdwg.mxu0
    %v253 = vmax.f32 %v214, 0.0
    %v254 = vmax.f32 %v216, 0.0
    %v255 = vmax.f32 %v219, 0.0
    %v256 = vmax.f32 %v221, 0.0
    %v257 = vmax.f32 %v224, 0.0
    %v258 = vmax.f32 %v226, 0.0
    %v259 = vmax.f32 %v229, 0.0
    %v260 = vmax.f32 %v231, 0.0
    %v261 = vmax.f32 %v234, 0.0
    %v262 = vmax.f32 %v236, 0.0
    %v263 = vmax.f32 %v239, 0.0
    %v264 = vmax.f32 %v241, 0.0
    %v265 = vmax.f32 %v244, 0.0
    %v266 = vmax.f32 %v246, 0.0
    %v267 = vmax.f32 %v249, 0.0
    %v268 = vmax.f32 %v251, 0.0
    %v269 = vld [vmem:[%s2] sm:$0xf]
    %v270 = vld [vmem:[%s2 + $0x4] sm:$0xf]
    %v271 = vld [vmem:[%s2 + $0x8] sm:$0xf]
    %v272 = vld [vmem:[%s2 + $0xc] sm:$0xf]
    %v273 = vpack.c.bf16 %v254, %v253
    %v274 = vpack.c.bf16 %v256, %v255
    %v275 = vpack.c.bf16 %v258, %v257
    %v276 = vpack.c.bf16 %v260, %v259
    %v277 = vpack.c.bf16 %v262, %v261
    %v278 = vpack.c.bf16 %v264, %v263
    %v279 = vpack.c.bf16 %v266, %v265
    %v280 = vpack.c.bf16 %v268, %v267
    %281 = vset.pattern.permute.xlu0 1
    %282 = vperm.xlu0 %281, %v21
    %v283 = vpop.permute.xlu0 %282
    %285 = vset.pattern.permute.xlu0 1
    %286 = vperm.xlu0 %285, %v22
    %v287 = vpop.permute.xlu0 %286
    %289 = vset.pattern.permute.xlu0 1
    %290 = vperm.xlu0 %289, %v23
    %v291 = vpop.permute.xlu0 %290
    %293 = vset.pattern.permute.xlu0 1
    %294 = vperm.xlu0 %293, %v24
    %v295 = vpop.permute.xlu0 %294
    %v301 = vunpack.c.l.b16 %v269
    %v302 = vunpack.c.l.b16 %v270
    %v303 = vunpack.c.l.b16 %v271
    %v304 = vunpack.c.l.b16 %v272
    %v305 = vpack.c.b16 %v302, %v301
    %v306 = vpack.c.b16 %v304, %v303
    %309 = vmatpush.bf16.msra.mxu0 %v280
    %310 = vmatpush.bf16.msra.mxu0 %v279
    %311 = vmatpush.bf16.msra.mxu0 %v278
    %312 = vmatpush.bf16.msra.mxu0 %v277
    %313 = vmatpush.bf16.msra.mxu0 %v276
    %314 = vmatpush.bf16.msra.mxu0 %v275
    %315 = vmatpush.bf16.msra.mxu0 %v274
    %316 = vmatpush.bf16.msra.mxu0 %v273
    %317 = vmatmul.bf16.gmra.mxu0 %v305
    %v318 = vpop.f32.mrf.mxu0
    %v319 = vadd.f32 %v283, %v318
    %v320 = vpop.f32.mrf.mxu0
    %v321 = vadd.f32 %v287, %v320
    %322 = vmatmul.bf16.gmra.mxu0 %v306
    %v323 = vpop.f32.mrf.mxu0
    %v324 = vadd.f32 %v291, %v323
    %v325 = vpop.f32.mrf.mxu0
    %v326 = vadd.f32 %v295, %v325
    %327 = vdwg.mxu0
    %v328 = vmax.f32 %v319, 0.0
    %v329 = vmax.f32 %v321, 0.0
    %v330 = vmax.f32 %v324, 0.0
    %v331 = vmax.f32 %v326, 0.0
    %332 = vset.pattern.permute.xlu0 2
    %333 = vperm.xlu0 %332, %v21
    %v334 = vpop.permute.xlu0 %333
    %336 = vset.pattern.permute.xlu0 2
    %337 = vperm.xlu0 %336, %v22
    %v338 = vpop.permute.xlu0 %337
    %340 = vset.pattern.permute.xlu0 2
    %341 = vperm.xlu0 %340, %v23
    %v342 = vpop.permute.xlu0 %341
    %344 = vset.pattern.permute.xlu0 2
    %345 = vperm.xlu0 %344, %v24
    %v346 = vpop.permute.xlu0 %345
    %v348 = vmul.f32 %v328, %v334
    %v349 = vmul.f32 %v329, %v338
    %v350 = vmul.f32 %v330, %v342
    %v351 = vmul.f32 %v331, %v346
    %v352 = vadd.f32 %v348, %v349
    %v353 = vadd.f32 %v352, %v350
    %v354 = vadd.f32 %v353, %v351
    %v355 = vrot.slane %v354, 4
    %v356 = vadd.f32 %v354, %v355
    %v357 = vrot.slane %v356, 2
    %v358 = vadd.f32 %v356, %v357
    %v359 = vrot.slane %v358, 1
    %v360 = vadd.f32 %v358, %v359
    %361 = vset.pattern.permute.xlu0 3
    %362 = vperm.xlu0 %361, %v21
    %v363 = vpop.permute.xlu0 %362
    %v365 = vadd.f32 %v360, %v363
    %366 = vst [vmem:[#allocation2] sm:$0x1] %v365
    // Predicated region
    $region18: #{tpu_custom_call.1} parent=1 // pred_check
      _
    $region19: #{tpu_custom_call.1} parent=1 // pred_check_branch
      %368 = sbr.rel (0) target = $region21
    $region20: #{tpu_custom_call.1} parent=1 // pred_region
      %370 = vsyncadd [#allocation3], 0
      %s372 = sshll.u32 [#allocation2], 4
      %s373 = int_to_ptr.vmem [resolvable:$true] %s372
      %s374 = sshll.u32 %s4, 4
      %s375 = int_to_ptr.hbm [resolvable:$true] %s374
      %377 = dma.vmem_to_hbm [thread:$0]  %s373, 16, %s375, [#allocation3]
    $region21: #{tpu_custom_call.1} parent=1 // pred_fallthru
      _
    // Predicated region
    $region22: #{tpu_custom_call.1} parent=1 // pred_check
      _
    $region23: #{tpu_custom_call.1} parent=1 // pred_check_branch
      %379 = sbr.rel (0) target = $region25
    $region24: #{tpu_custom_call.1} parent=1 // pred_region
      %381 = dma.done [#allocation3], 16
    $region25: #{tpu_custom_call.1} parent=1 // pred_fallthru
      _
    %382 = vsyncpa [#allocation3], 1

</llo_original>
